<compile_context>
chip_gen: v6e
topology: v6e:2x2x1
jax: 0.10.0
libtpu: 0.0.40
codegen_flags: <defaults>
</compile_context>

<pallas_src>
import math

import jax
import jax.numpy as jnp
from jax.experimental import pallas as pl
from jax.experimental.pallas import tpu as pltpu


def _round_up(x, m):
    return (x + m - 1) // m * m


def pick_tiles(n, *, tm=256, tk=1024):
    """Clamp the (row, reduction) tile sizes to the 128-aligned problem size."""
    n128 = _round_up(n, 128)
    return min(tm, n128), min(tk, n128)


# --------------------------------------------------------------------------- #
# Stage 1: support = X @ W   (computed once, stored bf16)                      #
# --------------------------------------------------------------------------- #
def _xw_kernel(x_ref, w_ref, support_ref):
    support_ref[...] = jnp.dot(
        x_ref[...], w_ref[...], preferred_element_type=jnp.float32
    ).astype(support_ref.dtype)


# --------------------------------------------------------------------------- #
# Stage 2: out = sum_v alpha_v * (adjs_v @ support) + bias                     #
# --------------------------------------------------------------------------- #
def _adj_mix_kernel(alpha_ref, adjs_ref, support_ref, bias_ref, out_ref):
    k = pl.program_id(1)
    n_view, _, tk = adjs_ref.shape

    @pl.when(k == 0)
    def _init():
        out_ref[...] = jnp.zeros_like(out_ref)

    # support is fully VMEM-resident; slice the reduction chunk in-kernel.
    start = pl.multiple_of(k * tk, 128)
    s = support_ref[pl.ds(start, tk), :]              # (tk, F_out_pad) bf16

    # Accumulate per view straight into the resident fp32 output tile: avoids a
    # separate VMEM scratch and keeps the live vreg footprint to one partial dot.
    for v in range(n_view):                           # static unroll (n_view small)
        out_ref[...] += alpha_ref[v] * jnp.dot(       # alpha_v: f32 scalar from SMEM
            adjs_ref[v], s, preferred_element_type=jnp.float32)

    @pl.when(k == pl.num_programs(1) - 1)
    def _bias():
        out_ref[...] += bias_ref[...]


# --------------------------------------------------------------------------- #
# Wrapper                                                                      #
# --------------------------------------------------------------------------- #
def prepare_adjacency(adjs, *, tm, tk):
    """Pad rows->mult(tm), cols->mult(tk), cast bf16.  Do ONCE per graph (hoisted
    out of the per-call path: the adjacency is the dominant HBM stream)."""
    n_view, n, _ = adjs.shape
    n_row_pad = _round_up(n, tm)
    n_red_pad = _round_up(n, tk)
    a_p = jnp.zeros((n_view, n_row_pad, n_red_pad), jnp.bfloat16)
    return a_p.at[:, :n, :n].set(adjs.astype(jnp.bfloat16))


def _stage2_vmem_bytes(n_view, tm, tk, n_red_pad, f_out_pad):
    adj = 2 * n_view * tm * tk * 2          # double-buffered bf16 adjacency tiles
    sup = 2 * n_red_pad * f_out_pad * 2     # resident bf16 support (conservative 2x)
    out = 2 * tm * f_out_pad * 4            # resident fp32 output tile
    bias = 2 * f_out_pad * 4
    return adj + sup + out + bias


def mixed_graph_convolution(x, weight, adjs_padded, alpha, bias, *, n=None,
                            tm, tk, vmem_limit_bytes=None):
    """out = (sum_v alpha_v * adjs_v) @ (x @ weight) + bias, all compute in Pallas.

    `adjs_padded` must come from prepare_adjacency(adjs, tm=tm, tk=tk).
    """
    if n is None:
        n = x.shape[0]
    f_in = x.shape[1]
    f_out = weight.shape[1]
    n_view, n_row_pad, n_red_pad = adjs_padded.shape
    f_out_pad = _round_up(f_out, 128)

    # Cheap per-call padding/casting of the small operands only.
    x_p = jnp.zeros((n_red_pad, f_in), jnp.bfloat16).at[:n, :].set(
        x.astype(jnp.bfloat16))
    w_p = jnp.zeros((f_in, f_out_pad), jnp.bfloat16).at[:, :f_out].set(
        weight.astype(jnp.bfloat16))
    b_p = jnp.zeros((1, f_out_pad), jnp.float32).at[0, :f_out].set(
        bias.astype(jnp.float32))
    alpha = alpha.astype(jnp.float32)

    if vmem_limit_bytes is None:
        needed = _stage2_vmem_bytes(n_view, tm, tk, n_red_pad, f_out_pad)
        vmem_limit_bytes = max(needed + 4 * 1024 * 1024, 32 * 1024 * 1024)
        # TODO(synk): for very large N, cap for v7x (64 MiB/TC) and re-tile the
        #             resident support instead of growing the limit further.

    # ---- Stage 1: support = X @ W (bf16 out, stored once) ----
    t1 = tk                                   # divides n_red_pad by construction
    support = pl.pallas_call(
        _xw_kernel,
        out_shape=jax.ShapeDtypeStruct((n_red_pad, f_out_pad), jnp.bfloat16),
        grid=(n_red_pad // t1,),
        in_specs=[
            pl.BlockSpec((t1, f_in), lambda i: (i, 0)),
            pl.BlockSpec((f_in, f_out_pad), lambda i: (0, 0)),
        ],
        out_specs=pl.BlockSpec((t1, f_out_pad), lambda i: (i, 0)),
        compiler_params=pltpu.CompilerParams(
            dimension_semantics=("parallel",),
            vmem_limit_bytes=vmem_limit_bytes),
        cost_estimate=pl.CostEstimate(
            flops=2 * n_red_pad * f_in * f_out_pad,
            transcendentals=0,
            bytes_accessed=(n_red_pad * f_in * 2 + f_in * f_out_pad * 2
                            + n_red_pad * f_out_pad * 2)),
    )(x_p, w_p)

    # ---- Stage 2: out = sum_v alpha_v * (adjs_v @ support) + bias ----
    grid = (n_row_pad // tm, n_red_pad // tk)
    out_p = pl.pallas_call(
        _adj_mix_kernel,
        out_shape=jax.ShapeDtypeStruct((n_row_pad, f_out_pad), jnp.float32),
        grid=grid,
        in_specs=[
            pl.BlockSpec(memory_space=pltpu.MemorySpace.SMEM),          # alpha (n_view,)
            pl.BlockSpec((n_view, tm, tk), lambda i, k: (0, i, k)),     # adjacency views
            pl.BlockSpec((n_red_pad, f_out_pad), lambda i, k: (0, 0)),  # support: resident
            pl.BlockSpec((1, f_out_pad), lambda i, k: (0, 0)),          # bias
        ],
        out_specs=pl.BlockSpec((tm, f_out_pad), lambda i, k: (i, 0)),   # resident fp32 acc
        compiler_params=pltpu.CompilerParams(
            dimension_semantics=("parallel", "arbitrary"),
            vmem_limit_bytes=vmem_limit_bytes),
        cost_estimate=pl.CostEstimate(
            flops=2 * n_view * n_row_pad * n_red_pad * f_out_pad,
            transcendentals=0,
            bytes_accessed=(n_view * n_row_pad * n_red_pad * 2   # adjacency (dominant)
                            + n_red_pad * f_out_pad * 2          # support, loaded once
                            + n_row_pad * f_out_pad * 4          # output
                            + f_out_pad * 4)),
    )(alpha, adjs_padded, support, b_p)

    return out_p[:n, :f_out]


def build_params(key, n, f_in, f_out, n_view):
    """Deterministic synthetic params matching the module's __init__ / _update_adj."""
    k_w, k_b, k_x, k_a = jax.random.split(key, 4)

    stdv = 1.0 / math.sqrt(f_out)
    weight = jax.random.uniform(k_w, (f_in, f_out), jnp.float32, -stdv, stdv)
    bias = jax.random.uniform(k_b, (f_out,), jnp.float32, -stdv, stdv)

    # n_view adjacency "views" (dense stand-ins for the sparse adjs).
    adjs = jax.random.uniform(k_a, (n_view, n, n), jnp.float32, 0.0, 1.0)

    # _update_adj: alpha = softmax(ones/n_view) -> uniform mixing weights
    alpha = jax.nn.softmax(jnp.ones((n_view,), jnp.float32) / n_view)

    x = jax.random.normal(k_x, (n, f_in), jnp.float32)
    return x, weight, adjs, alpha, bias


if __name__ == "__main__":
    # Small, deliberately unaligned shapes; demo tiles are kept modest so the grid
    # has multiple row tiles and multiple reduction tiles (exercises the resident
    # output accumulator and independent row/reduction padding).
    N, F_IN, F_OUT, N_VIEW = 520, 48, 96, 3
    x, weight, adjs, alpha, bias = build_params(
        jax.random.PRNGKey(0), N, F_IN, F_OUT, N_VIEW)

    tm, tk = pick_tiles(N, tm=128, tk=256)   # production default: pick_tiles(N) -> (256, 1024)

    # Hoisted pad+cast: do once per graph, reuse across forward calls.
    adjs_p = jax.block_until_ready(prepare_adjacency(adjs, tm=tm, tk=tk))

    out = mixed_graph_convolution(x, weight, adjs_p, alpha, bias, n=N, tm=tm, tk=tk)
    out = jax.block_until_ready(out)
    assert out.shape == (N, F_OUT)

    # Reference matching the kernel's quantization: bf16 operands, fp32 accumulate,
    # support rounded to bf16 between the two matmuls, per-view mix in fp32.
    xb = x.astype(jnp.bfloat16).astype(jnp.float32)
    wb = weight.astype(jnp.bfloat16).astype(jnp.float32)
    ab = adjs.astype(jnp.bfloat16).astype(jnp.float32)
    support_ref = jnp.dot(xb, wb).astype(jnp.bfloat16).astype(jnp.float32)
    ref = sum(alpha[v] * (ab[v] @ support_ref) for v in range(N_VIEW)) + bias[None, :]

    max_err = float(jnp.max(jnp.abs(out - ref)))
    assert jnp.allclose(out, ref, rtol=2e-2, atol=2e-2), max_err

    print("KERNEL_OK")
</pallas_src>

<mosaic_0001>
module attributes {stable_mosaic.version = 11 : i64} {
  func.func @_xw_kernel(%arg0: i32, %arg1: memref<256x48xbf16, #tpu.memory_space<vmem>>, %arg2: memref<48x128xbf16, #tpu.memory_space<vmem>>, %arg3: memref<256x128xbf16, #tpu.memory_space<vmem>>) attributes {dimension_semantics = [#tpu.dimension_semantics<parallel>], iteration_bounds = array<i64: 3>, scalar_prefetch = 0 : i64, scratch_operands = 0 : i64, tpu.core_type = #tpu.core_type<tc>, window_params = [{transform_indices = @transform_0, window_bounds = array<i64: 256, 48>}, {pipeline_mode = #tpu.pipeline_mode<synchronous>, transform_indices = @transform_1, window_bounds = array<i64: 48, 128>}, {transform_indices = @transform_2, window_bounds = array<i64: 256, 128>}]} {
    %c0 = arith.constant 0 : index
    %c0_0 = arith.constant 0 : index
    %0 = vector.load %arg1[%c0, %c0_0] : memref<256x48xbf16, #tpu.memory_space<vmem>>, vector<256x48xbf16>
    %c0_1 = arith.constant 0 : index
    %c0_2 = arith.constant 0 : index
    %1 = vector.load %arg2[%c0_1, %c0_2] : memref<48x128xbf16, #tpu.memory_space<vmem>>, vector<48x128xbf16>
    %cst = arith.constant dense<0.000000e+00> : vector<256x128xf32>
    %2 = tpu.matmul %0, %1, %cst {dimension_numbers = #tpu.dot_dimension_numbers<[1], [0], [0], [1], [0, 0, 1, 1], [], []>} : vector<256x48xbf16>, vector<48x128xbf16>, vector<256x128xf32> -> vector<256x128xf32>
    %3 = arith.truncf %2 : vector<256x128xf32> to vector<256x128xbf16>
    %c0_3 = arith.constant 0 : index
    %c0_4 = arith.constant 0 : index
    %4 = vector.load %arg3[%c0_3, %c0_4] : memref<256x128xbf16, #tpu.memory_space<vmem>>, vector<256x128xbf16>
    tpu.vector_store %arg3[%c0_3, %c0_4], %3 {strides = array<i32>} : memref<256x128xbf16, #tpu.memory_space<vmem>>, vector<256x128xbf16>,
    return
  }
  func.func @transform_0(%arg0: i32) -> (i32, i32) {
    %c0_i32 = arith.constant 0 : i32
    %c0_i32_0 = arith.constant 0 : i32
    return %arg0, %c0_i32 : i32, i32
  }
  func.func @transform_1(%arg0: i32) -> (i32, i32) {
    %c0_i32 = arith.constant 0 : i32
    %c0_i32_0 = arith.constant 0 : i32
    %c0_i32_1 = arith.constant 0 : i32
    return %c0_i32, %c0_i32_0 : i32, i32
  }
  func.func @transform_2(%arg0: i32) -> (i32, i32) {
    %c0_i32 = arith.constant 0 : i32
    %c0_i32_0 = arith.constant 0 : i32
    return %arg0, %c0_i32 : i32, i32
  }
}

</mosaic_0001>

<llo_original>
// kernel: tpu_custom_call.1
$region0: #{tpu_custom_call.1}
  #allocation0 [shape = 'u32[]', space=smem, size = 0x4, offset = 0x4, fixed_abs, tag = 'smem constant byte address 0x4 - core index']
  #allocation1 [shape = 'u32[144,128]{1,0:T(1,128)}', space=vmem, size = 0x12000, scoped, tag = 'internal scratch']
  %s0 = inlined_call_operand.vmem [shape: bf16[768,48], index: 0, kind: input, shape index: {}]
  %s1 = inlined_call_operand.vmem [shape: bf16[48,128], index: 1, kind: input, shape index: {}]
  %s2 = inlined_call_operand.hbm [shape: bf16[768,128], index: 2, kind: output, shape index: {}]
  %s3 = sld [smem:[#allocation0]]
  $region41: #{tpu_custom_call.1} parent=0
    _
  %s5 = ssub.s32 1, %s3
  %s6 = scalar_select 0, %s5, %s3
  $region1: #{tpu_custom_call.1} parent=0
    #allocation2 [shape = 'u8[131072]{0}', space=vmem, size = 0x20000, scoped, tag = 'output window, operand 0']
    #allocation3 [shape = 's32[2]{0}', space=sflag, size = 0x8, scoped, tag = 'scoped memory for tpu_custom_call.1']
    %7 = vsyncpa [#allocation3], 0
    %s8 = scalar_lea.sflag [#allocation3], 1
    %9 = vsyncpa %s8, 0
    loop: start=0, step=1, limit=5
    $region2: #{tpu_custom_call.1} parent=1 // loop_pre_header
      _
    $region3: #{tpu_custom_call.1} parent=1 // loop_header
      %s11 = sphi 0, %s15
      %p12 = scmp.ge.s32.totalorder %s11, 5
      %s21 = sphi 0, %s23
      %s24 = sphi 0, %s21
      %s25 = sphi 0, %s24
      %s41 = sphi 0, %s25
      %s45 = sphi 0, %s45
      %s47 = sphi 0, %s45
      %s48 = sphi 0, %s47
      %s62 = sphi 0, %s48
      %s68 = sphi 0, %s70
      %s71 = sphi 0, %s68
      %s72 = sphi 0, %s71
      %s88 = sphi 0, %s72
    $region4: #{tpu_custom_call.1} parent=1 // loop_header_branch
      %14 = sbr.rel (%p12) target = $region8
    $region5: #{tpu_custom_call.1} parent=1 // loop_body
      %s16 = ssub.s32 %s11, 1
      %s17 = ssub.s32 %s11, 2
      %s18 = sadd.s32 %s11, 1
      %s19 = ssub.s32 %s11, %s18
      %p20 = scmp.eq.s32.totalorder %s19, 0
      %s22 = sadd.s32 %s21, 1
      %s23 = scalar_select %p20, %s21, %s22
      %p26 = pneg %p20
      %p27 = scmp.eq.s32.totalorder %s11, 2
      %p28 = por %p26, %p27
      %p29 = scmp.ne.s32.totalorder %s21, %s24
      %p30 = scmp.eq.s32.totalorder %s11, 0
      %p31 = por %p29, %p30
      %p32 = scmp.ne.s32.totalorder %s21, %s24
      %p33 = scmp.eq.s32.totalorder %s16, 2
      %p34 = por %p32, %p33
      %p35 = scmp.ne.s32.totalorder %s24, %s25
      %p36 = scmp.eq.s32.totalorder %s16, 0
      %p37 = por %p35, %p36
      %p38 = scmp.ne.s32.totalorder %s24, %s25
      %p39 = scmp.eq.s32.totalorder %s17, 2
      %p40 = por %p38, %p39
      %p42 = scmp.ne.s32.totalorder %s25, %s41
      %p43 = scmp.eq.s32.totalorder %s17, 0
      %p44 = por %p42, %p43
      %s46 = sadd.s32 %s45, 1
      %p49 = scmp.eq.s32.totalorder %s11, 2
      %p50 = scmp.ne.s32.totalorder %s45, %s47
      %p51 = scmp.eq.s32.totalorder %s11, 0
      %p52 = por %p50, %p51
      %p53 = scmp.ne.s32.totalorder %s45, %s47
      %p54 = scmp.eq.s32.totalorder %s16, 2
      %p55 = por %p53, %p54
      %p56 = scmp.ne.s32.totalorder %s47, %s48
      %p57 = scmp.eq.s32.totalorder %s16, 0
      %p58 = por %p56, %p57
      %p59 = scmp.ne.s32.totalorder %s47, %s48
      %p60 = scmp.eq.s32.totalorder %s17, 2
      %p61 = por %p59, %p60
      %p63 = scmp.ne.s32.totalorder %s48, %s62
      %p64 = scmp.eq.s32.totalorder %s17, 0
      %p65 = por %p63, %p64
      %s66 = ssub.s32 %s11, %s18
      %p67 = scmp.eq.s32.totalorder %s66, 0
      %s69 = sadd.s32 %s68, 1
      %s70 = scalar_select %p67, %s68, %s69
      %p73 = pneg %p67
      %p74 = scmp.eq.s32.totalorder %s11, 2
      %p75 = por %p73, %p74
      %p76 = scmp.ne.s32.totalorder %s68, %s71
      %p77 = scmp.eq.s32.totalorder %s11, 0
      %p78 = por %p76, %p77
      %p79 = scmp.ne.s32.totalorder %s68, %s71
      %p80 = scmp.eq.s32.totalorder %s16, 2
      %p81 = por %p79, %p80
      %p82 = scmp.ne.s32.totalorder %s71, %s72
      %p83 = scmp.eq.s32.totalorder %s16, 0
      %p84 = por %p82, %p83
      %p85 = scmp.ne.s32.totalorder %s71, %s72
      %p86 = scmp.eq.s32.totalorder %s17, 2
      %p87 = por %p85, %p86
      %p89 = scmp.ne.s32.totalorder %s72, %s88
      %p90 = scmp.eq.s32.totalorder %s17, 0
      %p91 = por %p89, %p90
      %p92 = scmp.le.s32.totalorder 1, %s11
      %p93 = scmp.lt.s32.totalorder %s11, 4
      %p94 = pnand %p92, %p93
      %p95 = pneg %p94
      // Predicated region
      $region9: #{tpu_custom_call.1} parent=5 // pred_check
        _
      $region10: #{tpu_custom_call.1} parent=5 // pred_check_branch
        %97 = sbr.rel (%p94) target = $region12
      $region11: #{tpu_custom_call.1} parent=5 // pred_region
        %s98 = ssub.s32 %s11, 1
        // Predicated region
        $region13: #{tpu_custom_call.1} parent=11 // pred_check
          %p99 = pneg %p58
        $region14: #{tpu_custom_call.1} parent=11 // pred_check_branch
          %101 = sbr.rel (%p99) target = $region16
        $region15: #{tpu_custom_call.1} parent=11 // pred_region
          _
        $region16: #{tpu_custom_call.1} parent=11 // pred_fallthru
          _
      $region12: #{tpu_custom_call.1} parent=5 // pred_fallthru
        _
      %p102 = scmp.lt.s32.totalorder %s11, 3
      // Predicated region
      $region17: #{tpu_custom_call.1} parent=5 // pred_check
        %p103 = pneg %p102
      $region18: #{tpu_custom_call.1} parent=5 // pred_check_branch
        %105 = sbr.rel (%p103) target = $region20
      $region19: #{tpu_custom_call.1} parent=5 // pred_region
        // Predicated region
        $region21: #{tpu_custom_call.1} parent=19 // pred_check
          %p106 = pneg %p31
        $region22: #{tpu_custom_call.1} parent=19 // pred_check_branch
          %108 = sbr.rel (%p106) target = $region24
        $region23: #{tpu_custom_call.1} parent=19 // pred_region
          %s109 = smul.u32 32, %s11
          %p110 = scmp.lt.s32.totalorder %s109, 95
          %s111 = scalar_select %p110, %s109, 95
          %s112 = smul.addr %s111, 4
          %s113 = scalar_lea.vmem %s0, %s112
          %s114 = smul.u32 32, %s11
        $region24: #{tpu_custom_call.1} parent=19 // pred_fallthru
          _
      $region20: #{tpu_custom_call.1} parent=5 // pred_fallthru
        _
      %p115 = scmp.le.s32.totalorder 1, %s11
      %p116 = scmp.lt.s32.totalorder %s11, 4
      %p117 = pnand %p115, %p116
      %p118 = pneg %p117
      // Predicated region
      $region25: #{tpu_custom_call.1} parent=5 // pred_check
        _
      $region26: #{tpu_custom_call.1} parent=5 // pred_check_branch
        %120 = sbr.rel (%p117) target = $region28
      $region27: #{tpu_custom_call.1} parent=5 // pred_region
        %s121 = ssub.s32 %s11, 1
        %s122 = smul.u32 32, %s16
        %p123 = scmp.lt.s32.totalorder %s122, 95
        %s124 = scalar_select %p123, %s122, 95
        %s125 = smul.addr %s124, 4
        %s126 = scalar_lea.vmem %s0, %s125
        %p127 = pneg %p37
        %p128 = pneg %p34
        %p129 = pneg %p58
        %p130 = pneg %p55
        %p131 = pneg %p84
        %p132 = pneg %p81
        %s133 = sand.u32 %s71, 1
        %s134 = scalar_lea.sflag [#allocation3], %s133
        %s135 = sand.u32 %s71, 1
        %s136 = smul.addr %s135, 128
        %s137 = scalar_lea.vmem [#allocation2], %s136
        %s138 = smul.u32 32, %s16
        %p139 = scmp.lt.s32.totalorder %s138, 95
        %s140 = scalar_select %p139, %s138, 95
        %s141 = smul.addr %s140, 4
        %s142 = scalar_lea.vmem %s0, %s141
        %s143 = smul.u32 32, %s16
        %s144 = smul.u32 32, %s16
        %v146 = vld [vmem:[%s142] sm:$0xf]
        %v147 = vld [vmem:[%s142 + $0x4] sm:$0xf]
        %v148 = vld [vmem:[%s142 + $0x8] sm:$0xf]
        %v149 = vld [vmem:[%s142 + $0xc] sm:$0xf]
        %v150 = vld [vmem:[%s142 + $0x10] sm:$0xf]
        %v151 = vld [vmem:[%s142 + $0x14] sm:$0xf]
        %v152 = vld [vmem:[%s142 + $0x18] sm:$0xf]
        %v153 = vld [vmem:[%s142 + $0x1c] sm:$0xf]
        %v154 = vld [vmem:[%s142 + $0x20] sm:$0xf]
        %v155 = vld [vmem:[%s142 + $0x24] sm:$0xf]
        %v156 = vld [vmem:[%s142 + $0x28] sm:$0xf]
        %v157 = vld [vmem:[%s142 + $0x2c] sm:$0xf]
        %v158 = vld [vmem:[%s142 + $0x30] sm:$0xf]
        %v159 = vld [vmem:[%s142 + $0x34] sm:$0xf]
        %v160 = vld [vmem:[%s142 + $0x38] sm:$0xf]
        %v161 = vld [vmem:[%s142 + $0x3c] sm:$0xf]
        %v162 = vld [vmem:[%s142 + $0x40] sm:$0xf]
        %v163 = vld [vmem:[%s142 + $0x44] sm:$0xf]
        %v164 = vld [vmem:[%s142 + $0x48] sm:$0xf]
        %v165 = vld [vmem:[%s142 + $0x4c] sm:$0xf]
        %v166 = vld [vmem:[%s142 + $0x50] sm:$0xf]
        %v167 = vld [vmem:[%s142 + $0x54] sm:$0xf]
        %v168 = vld [vmem:[%s142 + $0x58] sm:$0xf]
        %v169 = vld [vmem:[%s142 + $0x5c] sm:$0xf]
        %v170 = vld [vmem:[%s142 + $0x60] sm:$0xf]
        %v171 = vld [vmem:[%s142 + $0x64] sm:$0xf]
        %v172 = vld [vmem:[%s142 + $0x68] sm:$0xf]
        %v173 = vld [vmem:[%s142 + $0x6c] sm:$0xf]
        %v174 = vld [vmem:[%s142 + $0x70] sm:$0xf]
        %v175 = vld [vmem:[%s142 + $0x74] sm:$0xf]
        %v176 = vld [vmem:[%s142 + $0x78] sm:$0xf]
        %v177 = vld [vmem:[%s142 + $0x7c] sm:$0xf]
        %v178 = vld [vmem:[%s1] sm:$0xf]
        %v179 = vld [vmem:[%s1 + $0x4] sm:$0xf]
        %v180 = vld [vmem:[%s1 + $0x8] sm:$0xf]
        %v181 = vld [vmem:[%s1 + $0xc] sm:$0xf]
        %v182 = vld [vmem:[%s1 + $0x10] sm:$0xf]
        %v183 = vld [vmem:[%s1 + $0x14] sm:$0xf]
        %v216 = vunpack.c.l.b16 %v146
        %v217 = vunpack.c.l.b16 %v147
        %v218 = vunpack.c.l.b16 %v148
        %v219 = vunpack.c.l.b16 %v149
        %v220 = vunpack.c.l.b16 %v150
        %v221 = vunpack.c.l.b16 %v151
        %v222 = vunpack.c.l.b16 %v152
        %v223 = vunpack.c.l.b16 %v153
        %v224 = vunpack.c.l.b16 %v154
        %v225 = vunpack.c.l.b16 %v155
        %v226 = vunpack.c.l.b16 %v156
        %v227 = vunpack.c.l.b16 %v157
        %v228 = vunpack.c.l.b16 %v158
        %v229 = vunpack.c.l.b16 %v159
        %v230 = vunpack.c.l.b16 %v160
        %v231 = vunpack.c.l.b16 %v161
        %v232 = vunpack.c.l.b16 %v162
        %v233 = vunpack.c.l.b16 %v163
        %v234 = vunpack.c.l.b16 %v164
        %v235 = vunpack.c.l.b16 %v165
        %v236 = vunpack.c.l.b16 %v166
        %v237 = vunpack.c.l.b16 %v167
        %v238 = vunpack.c.l.b16 %v168
        %v239 = vunpack.c.l.b16 %v169
        %v240 = vunpack.c.l.b16 %v170
        %v241 = vunpack.c.l.b16 %v171
        %v242 = vunpack.c.l.b16 %v172
        %v243 = vunpack.c.l.b16 %v173
        %v244 = vunpack.c.l.b16 %v174
        %v245 = vunpack.c.l.b16 %v175
        %v246 = vunpack.c.l.b16 %v176
        %v247 = vunpack.c.l.b16 %v177
        %v248 = vpack.c.b16 %v217, %v216
        %v249 = vpack.c.b16 %v219, %v218
        %v250 = vpack.c.b16 %v221, %v220
        %v251 = vpack.c.b16 %v223, %v222
        %v252 = vpack.c.b16 %v225, %v224
        %v253 = vpack.c.b16 %v227, %v226
        %v254 = vpack.c.b16 %v229, %v228
        %v255 = vpack.c.b16 %v231, %v230
        %v256 = vpack.c.b16 %v233, %v232
        %v257 = vpack.c.b16 %v235, %v234
        %v258 = vpack.c.b16 %v237, %v236
        %v259 = vpack.c.b16 %v239, %v238
        %v260 = vpack.c.b16 %v241, %v240
        %v261 = vpack.c.b16 %v243, %v242
        %v262 = vpack.c.b16 %v245, %v244
        %v263 = vpack.c.b16 %v247, %v246
        %v270 = vunpack.c.l.b16 %v178
        %v271 = vunpack.c.l.b16 %v179
        %v272 = vunpack.c.l.b16 %v180
        %v273 = vunpack.c.l.b16 %v181
        %v274 = vunpack.c.l.b16 %v182
        %v275 = vunpack.c.l.b16 %v183
        %v276 = vpack.c.b16 %v271, %v270
        %v277 = vpack.c.b16 %v273, %v272
        %v278 = vpack.c.b16 %v275, %v274
        %vm282 = vcmask 392192
        %v284 = vsel %vm282, %v248, 0
        %v287 = vsel %vm282, %v249, 0
        %v290 = vsel %vm282, %v250, 0
        %v293 = vsel %vm282, %v251, 0
        %v296 = vsel %vm282, %v252, 0
        %v299 = vsel %vm282, %v253, 0
        %v302 = vsel %vm282, %v254, 0
        %v305 = vsel %vm282, %v255, 0
        %v308 = vsel %vm282, %v256, 0
        %v311 = vsel %vm282, %v257, 0
        %v314 = vsel %vm282, %v258, 0
        %v317 = vsel %vm282, %v259, 0
        %v320 = vsel %vm282, %v260, 0
        %v323 = vsel %vm282, %v261, 0
        %v326 = vsel %vm282, %v262, 0
        %v329 = vsel %vm282, %v263, 0
        %331 = vmatprep.subr.bf16.mxu0 0
        %332 = vmatpush1.bf16.msra.mxu0 0
        %333 = vmatprep.subr.bf16.mxu0 0
        %334 = vmatpush1.bf16.msra.mxu0 0
        %335 = vmatprep.subr.bf16.mxu0 0
        %336 = vmatpush1.bf16.msra.mxu0 0
        %337 = vmatprep.subr.bf16.mxu0 0
        %338 = vmatpush1.bf16.msra.mxu0 0
        %339 = vmatprep.subr.bf16.mxu0 0
        %340 = vmatpush1.bf16.msra.mxu0 0
        %341 = vmatprep.subr.bf16.mxu0 0
        %342 = vmatpush1.bf16.msra.mxu0 %v278
        %343 = vmatprep.subr.bf16.mxu0 0
        %344 = vmatpush1.bf16.msra.mxu0 %v277
        %345 = vmatprep.subr.bf16.mxu0 0
        %346 = vmatpush1.bf16.msra.mxu0 %v276
        %347 = vmatprep.subr.bf16.mxu0 0
        %348 = vmatpush2.bf16.msra.mxu0 0
        %349 = vmatprep.subr.bf16.mxu0 0
        %350 = vmatpush2.bf16.msra.mxu0 0
        %351 = vmatprep.subr.bf16.mxu0 0
        %352 = vmatpush2.bf16.msra.mxu0 0
        %353 = vmatprep.subr.bf16.mxu0 0
        %354 = vmatpush2.bf16.msra.mxu0 0
        %355 = vmatprep.subr.bf16.mxu0 0
        %356 = vmatpush2.bf16.msra.mxu0 0
        %357 = vmatprep.subr.bf16.mxu0 0
        %358 = vmatpush2.bf16.msra.mxu0 0
        %359 = vmatprep.subr.bf16.mxu0 0
        %360 = vmatpush2.bf16.msra.mxu0 0
        %361 = vmatprep.subr.bf16.mxu0 0
        %362 = vmatpush2.bf16.msra.mxu0 0
        %363 = vmatprep.mubr.bf16.mxu0 0
        %364 = vmatmul.mubr.bf16.gmra.mxu0 %v284
        %v365 = vpop.f32.mrf.mxu0
        %v366 = vadd.f32 0.0, %v365
        %v367 = vpop.f32.mrf.mxu0
        %v368 = vpop.f32.mrf.mxu0
        %v369 = vadd.f32 0.0, %v368
        %v370 = vpop.f32.mrf.mxu0
        %371 = vmatprep.mubr.bf16.mxu0 0
        %372 = vmatmul.mubr.bf16.gmra.mxu0 %v287
        %v373 = vpop.f32.mrf.mxu0
        %v374 = vadd.f32 0.0, %v373
        %v375 = vpop.f32.mrf.mxu0
        %v376 = vpop.f32.mrf.mxu0
        %v377 = vadd.f32 0.0, %v376
        %v378 = vpop.f32.mrf.mxu0
        %379 = vmatprep.mubr.bf16.mxu0 0
        %380 = vmatmul.mubr.bf16.gmra.mxu0 %v290
        %v381 = vpop.f32.mrf.mxu0
        %v382 = vadd.f32 0.0, %v381
        %v383 = vpop.f32.mrf.mxu0
        %v384 = vpop.f32.mrf.mxu0
        %v385 = vadd.f32 0.0, %v384
        %v386 = vpop.f32.mrf.mxu0
        %387 = vmatprep.mubr.bf16.mxu0 0
        %388 = vmatmul.mubr.bf16.gmra.mxu0 %v293
        %v389 = vpop.f32.mrf.mxu0
        %v390 = vadd.f32 0.0, %v389
        %v391 = vpop.f32.mrf.mxu0
        %v392 = vpop.f32.mrf.mxu0
        %v393 = vadd.f32 0.0, %v392
        %v394 = vpop.f32.mrf.mxu0
        %395 = vmatprep.mubr.bf16.mxu0 0
        %396 = vmatmul.mubr.bf16.gmra.mxu0 %v296
        %v397 = vpop.f32.mrf.mxu0
        %v398 = vadd.f32 0.0, %v397
        %v399 = vpop.f32.mrf.mxu0
        %v400 = vpop.f32.mrf.mxu0
        %v401 = vadd.f32 0.0, %v400
        %v402 = vpop.f32.mrf.mxu0
        %403 = vmatprep.mubr.bf16.mxu0 0
        %404 = vmatmul.mubr.bf16.gmra.mxu0 %v299
        %v405 = vpop.f32.mrf.mxu0
        %v406 = vadd.f32 0.0, %v405
        %v407 = vpop.f32.mrf.mxu0
        %v408 = vpop.f32.mrf.mxu0
        %v409 = vadd.f32 0.0, %v408
        %v410 = vpop.f32.mrf.mxu0
        %411 = vmatprep.mubr.bf16.mxu0 0
        %412 = vmatmul.mubr.bf16.gmra.mxu0 %v302
        %v413 = vpop.f32.mrf.mxu0
        %v414 = vadd.f32 0.0, %v413
        %v415 = vpop.f32.mrf.mxu0
        %v416 = vpop.f32.mrf.mxu0
        %v417 = vadd.f32 0.0, %v416
        %v418 = vpop.f32.mrf.mxu0
        %419 = vmatprep.mubr.bf16.mxu0 0
        %420 = vmatmul.mubr.bf16.gmra.mxu0 %v305
        %v421 = vpop.f32.mrf.mxu0
        %v422 = vadd.f32 0.0, %v421
        %v423 = vpop.f32.mrf.mxu0
        %v424 = vpop.f32.mrf.mxu0
        %v425 = vadd.f32 0.0, %v424
        %v426 = vpop.f32.mrf.mxu0
        %427 = vmatprep.mubr.bf16.mxu0 0
        %428 = vmatmul.mubr.bf16.gmra.mxu0 %v308
        %v429 = vpop.f32.mrf.mxu0
        %v430 = vadd.f32 0.0, %v429
        %v431 = vpop.f32.mrf.mxu0
        %v432 = vpop.f32.mrf.mxu0
        %v433 = vadd.f32 0.0, %v432
        %v434 = vpop.f32.mrf.mxu0
        %435 = vmatprep.mubr.bf16.mxu0 0
        %436 = vmatmul.mubr.bf16.gmra.mxu0 %v311
        %v437 = vpop.f32.mrf.mxu0
        %v438 = vadd.f32 0.0, %v437
        %v439 = vpop.f32.mrf.mxu0
        %v440 = vpop.f32.mrf.mxu0
        %v441 = vadd.f32 0.0, %v440
        %v442 = vpop.f32.mrf.mxu0
        %443 = vmatprep.mubr.bf16.mxu0 0
        %444 = vmatmul.mubr.bf16.gmra.mxu0 %v314
        %v445 = vpop.f32.mrf.mxu0
        %v446 = vadd.f32 0.0, %v445
        %v447 = vpop.f32.mrf.mxu0
        %v448 = vpop.f32.mrf.mxu0
        %v449 = vadd.f32 0.0, %v448
        %v450 = vpop.f32.mrf.mxu0
        %451 = vmatprep.mubr.bf16.mxu0 0
        %452 = vmatmul.mubr.bf16.gmra.mxu0 %v317
        %v453 = vpop.f32.mrf.mxu0
        %v454 = vadd.f32 0.0, %v453
        %v455 = vpop.f32.mrf.mxu0
        %v456 = vpop.f32.mrf.mxu0
        %v457 = vadd.f32 0.0, %v456
        %v458 = vpop.f32.mrf.mxu0
        %459 = vmatprep.mubr.bf16.mxu0 0
        %460 = vmatmul.mubr.bf16.gmra.mxu0 %v320
        %v461 = vpop.f32.mrf.mxu0
        %v462 = vadd.f32 0.0, %v461
        %v463 = vpop.f32.mrf.mxu0
        %v464 = vpop.f32.mrf.mxu0
        %v465 = vadd.f32 0.0, %v464
        %v466 = vpop.f32.mrf.mxu0
        %467 = vmatprep.mubr.bf16.mxu0 0
        %468 = vmatmul.mubr.bf16.gmra.mxu0 %v323
        %v469 = vpop.f32.mrf.mxu0
        %v470 = vadd.f32 0.0, %v469
        %v471 = vpop.f32.mrf.mxu0
        %v472 = vpop.f32.mrf.mxu0
        %v473 = vadd.f32 0.0, %v472
        %v474 = vpop.f32.mrf.mxu0
        %475 = vmatprep.mubr.bf16.mxu0 0
        %476 = vmatmul.mubr.bf16.gmra.mxu0 %v326
        %v477 = vpop.f32.mrf.mxu0
        %v478 = vadd.f32 0.0, %v477
        %v479 = vpop.f32.mrf.mxu0
        %v480 = vpop.f32.mrf.mxu0
        %v481 = vadd.f32 0.0, %v480
        %v482 = vpop.f32.mrf.mxu0
        %483 = vmatprep.mubr.bf16.mxu0 0
        %484 = vmatmul.mubr.bf16.gmra.mxu0 %v329
        %v485 = vpop.f32.mrf.mxu0
        %v486 = vadd.f32 0.0, %v485
        %v487 = vpop.f32.mrf.mxu0
        %v488 = vpop.f32.mrf.mxu0
        %v489 = vadd.f32 0.0, %v488
        %v490 = vpop.f32.mrf.mxu0
        %491 = vdwg.mxu0
        %v492 = vpack.c.bf16 %v369, %v366
        %v493 = vpack.c.bf16 %v377, %v374
        %v494 = vpack.c.bf16 %v385, %v382
        %v495 = vpack.c.bf16 %v393, %v390
        %v496 = vpack.c.bf16 %v401, %v398
        %v497 = vpack.c.bf16 %v409, %v406
        %v498 = vpack.c.bf16 %v417, %v414
        %v499 = vpack.c.bf16 %v425, %v422
        %v500 = vpack.c.bf16 %v433, %v430
        %v501 = vpack.c.bf16 %v441, %v438
        %v502 = vpack.c.bf16 %v449, %v446
        %v503 = vpack.c.bf16 %v457, %v454
        %v504 = vpack.c.bf16 %v465, %v462
        %v505 = vpack.c.bf16 %v473, %v470
        %v506 = vpack.c.bf16 %v481, %v478
        %v507 = vpack.c.bf16 %v489, %v486
        %v524 = vunpack.c.l.b16 %v492
        %v525 = vunpack.c.h.b16 %v492
        %v526 = vunpack.c.l.b16 %v493
        %v527 = vunpack.c.h.b16 %v493
        %v528 = vunpack.c.l.b16 %v494
        %v529 = vunpack.c.h.b16 %v494
        %v530 = vunpack.c.l.b16 %v495
        %v531 = vunpack.c.h.b16 %v495
        %v532 = vunpack.c.l.b16 %v496
        %v533 = vunpack.c.h.b16 %v496
        %v534 = vunpack.c.l.b16 %v497
        %v535 = vunpack.c.h.b16 %v497
        %v536 = vunpack.c.l.b16 %v498
        %v537 = vunpack.c.h.b16 %v498
        %v538 = vunpack.c.l.b16 %v499
        %v539 = vunpack.c.h.b16 %v499
        %v540 = vunpack.c.l.b16 %v500
        %v541 = vunpack.c.h.b16 %v500
        %v542 = vunpack.c.l.b16 %v501
        %v543 = vunpack.c.h.b16 %v501
        %v544 = vunpack.c.l.b16 %v502
        %v545 = vunpack.c.h.b16 %v502
        %v546 = vunpack.c.l.b16 %v503
        %v547 = vunpack.c.h.b16 %v503
        %v548 = vunpack.c.l.b16 %v504
        %v549 = vunpack.c.h.b16 %v504
        %v550 = vunpack.c.l.b16 %v505
        %v551 = vunpack.c.h.b16 %v505
        %v552 = vunpack.c.l.b16 %v506
        %v553 = vunpack.c.h.b16 %v506
        %v554 = vunpack.c.l.b16 %v507
        %v555 = vunpack.c.h.b16 %v507
        %v556 = vpack.c.b16 %v524, %v524
        %v557 = vpack.c.b16 %v525, %v525
        %v558 = vpack.c.b16 %v526, %v526
        %v559 = vpack.c.b16 %v527, %v527
        %v560 = vpack.c.b16 %v528, %v528
        %v561 = vpack.c.b16 %v529, %v529
        %v562 = vpack.c.b16 %v530, %v530
        %v563 = vpack.c.b16 %v531, %v531
        %v564 = vpack.c.b16 %v532, %v532
        %v565 = vpack.c.b16 %v533, %v533
        %v566 = vpack.c.b16 %v534, %v534
        %v567 = vpack.c.b16 %v535, %v535
        %v568 = vpack.c.b16 %v536, %v536
        %v569 = vpack.c.b16 %v537, %v537
        %v570 = vpack.c.b16 %v538, %v538
        %v571 = vpack.c.b16 %v539, %v539
        %v572 = vpack.c.b16 %v540, %v540
        %v573 = vpack.c.b16 %v541, %v541
        %v574 = vpack.c.b16 %v542, %v542
        %v575 = vpack.c.b16 %v543, %v543
        %v576 = vpack.c.b16 %v544, %v544
        %v577 = vpack.c.b16 %v545, %v545
        %v578 = vpack.c.b16 %v546, %v546
        %v579 = vpack.c.b16 %v547, %v547
        %v580 = vpack.c.b16 %v548, %v548
        %v581 = vpack.c.b16 %v549, %v549
        %v582 = vpack.c.b16 %v550, %v550
        %v583 = vpack.c.b16 %v551, %v551
        %v584 = vpack.c.b16 %v552, %v552
        %v585 = vpack.c.b16 %v553, %v553
        %v586 = vpack.c.b16 %v554, %v554
        %v587 = vpack.c.b16 %v555, %v555
        %620 = vst [vmem:[%s137] sm:$0xf] %v556
        %621 = vst [vmem:[%s137 + $0x4] sm:$0xf] %v557
        %622 = vst [vmem:[%s137 + $0x8] sm:$0xf] %v558
        %623 = vst [vmem:[%s137 + $0xc] sm:$0xf] %v559
        %624 = vst [vmem:[%s137 + $0x10] sm:$0xf] %v560
        %625 = vst [vmem:[%s137 + $0x14] sm:$0xf] %v561
        %626 = vst [vmem:[%s137 + $0x18] sm:$0xf] %v562
        %627 = vst [vmem:[%s137 + $0x1c] sm:$0xf] %v563
        %628 = vst [vmem:[%s137 + $0x20] sm:$0xf] %v564
        %629 = vst [vmem:[%s137 + $0x24] sm:$0xf] %v565
        %630 = vst [vmem:[%s137 + $0x28] sm:$0xf] %v566
        %631 = vst [vmem:[%s137 + $0x2c] sm:$0xf] %v567
        %632 = vst [vmem:[%s137 + $0x30] sm:$0xf] %v568
        %633 = vst [vmem:[%s137 + $0x34] sm:$0xf] %v569
        %634 = vst [vmem:[%s137 + $0x38] sm:$0xf] %v570
        %635 = vst [vmem:[%s137 + $0x3c] sm:$0xf] %v571
        %636 = vst [vmem:[%s137 + $0x40] sm:$0xf] %v572
        %637 = vst [vmem:[%s137 + $0x44] sm:$0xf] %v573
        %638 = vst [vmem:[%s137 + $0x48] sm:$0xf] %v574
        %639 = vst [vmem:[%s137 + $0x4c] sm:$0xf] %v575
        %640 = vst [vmem:[%s137 + $0x50] sm:$0xf] %v576
        %641 = vst [vmem:[%s137 + $0x54] sm:$0xf] %v577
        %642 = vst [vmem:[%s137 + $0x58] sm:$0xf] %v578
        %643 = vst [vmem:[%s137 + $0x5c] sm:$0xf] %v579
        %644 = vst [vmem:[%s137 + $0x60] sm:$0xf] %v580
        %645 = vst [vmem:[%s137 + $0x64] sm:$0xf] %v581
        %646 = vst [vmem:[%s137 + $0x68] sm:$0xf] %v582
        %647 = vst [vmem:[%s137 + $0x6c] sm:$0xf] %v583
        %648 = vst [vmem:[%s137 + $0x70] sm:$0xf] %v584
        %649 = vst [vmem:[%s137 + $0x74] sm:$0xf] %v585
        %650 = vst [vmem:[%s137 + $0x78] sm:$0xf] %v586
        %651 = vst [vmem:[%s137 + $0x7c] sm:$0xf] %v587
        %s652 = sand.u32 %s71, 1
        %s653 = scalar_lea.sflag [#allocation3], %s652
        %s654 = sand.u32 %s71, 1
        %s655 = smul.addr %s654, 128
        %s656 = scalar_lea.vmem [#allocation2], %s655
        // Predicated region
        $region29: #{tpu_custom_call.1} parent=27 // pred_check
          %p657 = pneg %p81
        $region30: #{tpu_custom_call.1} parent=27 // pred_check_branch
          %659 = sbr.rel (%p657) target = $region32
        $region31: #{tpu_custom_call.1} parent=27 // pred_region
          %s660 = smul.u32 32, %s16
          %s662 = ssub.s32 2048, 2048
          %663 = vsyncadd %s653, %s662
          %s664 = smul.addr %s660, 64
          %s665 = scalar_lea.hbm %s2, %s664
          %s666 = sshll.u32 %s656, 4
          %s667 = int_to_ptr.vmem [resolvable:$true] %s666
          %672 = dma.vmem_to_hbm [thread:$0]  %s667, 2048, %s665, %s653, 64, 64, 4
        $region32: #{tpu_custom_call.1} parent=27 // pred_fallthru
          _
      $region28: #{tpu_custom_call.1} parent=5 // pred_fallthru
        _
      %p673 = scmp.le.s32.totalorder 2, %s11
      // Predicated region
      $region33: #{tpu_custom_call.1} parent=5 // pred_check
        %p674 = pneg %p673
      $region34: #{tpu_custom_call.1} parent=5 // pred_check_branch
        %676 = sbr.rel (%p674) target = $region36
      $region35: #{tpu_custom_call.1} parent=5 // pred_region
        %s677 = ssub.s32 %s11, 2
        // Predicated region
        $region37: #{tpu_custom_call.1} parent=35 // pred_check
          %p678 = pneg %p87
        $region38: #{tpu_custom_call.1} parent=35 // pred_check_branch
          %680 = sbr.rel (%p678) target = $region40
        $region39: #{tpu_custom_call.1} parent=35 // pred_region
          %s681 = sand.u32 %s72, 1
          %s682 = scalar_lea.sflag [#allocation3], %s681
          %s683 = sand.u32 %s72, 1
          %s684 = smul.addr %s683, 128
          %s685 = scalar_lea.vmem [#allocation2], %s684
          %686 = dma.done %s682, 2048
        $region40: #{tpu_custom_call.1} parent=35 // pred_fallthru
          _
      $region36: #{tpu_custom_call.1} parent=5 // pred_fallthru
        _
    $region6: #{tpu_custom_call.1} parent=1 // loop_footer
      %s15 = sadd.s32 1, %s11
    $region7: #{tpu_custom_call.1} parent=1 // loop_footer_branch
      %10 = sbr.rel target = $region3
    $region8: #{tpu_custom_call.1} parent=1 // loop_exit
      _
    %687 = vsyncpa [#allocation3], 1
    %s688 = scalar_lea.sflag [#allocation3], 1
    %689 = vsyncpa %s688, 1

</llo_original>
